<compile_context>
chip_gen: v5e
topology: v5e:2x2
jax: 0.10.0
libtpu: 0.0.40
codegen_flags: <defaults>
</compile_context>

<pallas_src>
import functools

import jax
import jax.numpy as jnp
from jax.experimental import pallas as pl
from jax.experimental.pallas import tpu as pltpu


# k_size -> (k0 of conv0h/v, ks of conv_spatial_h/v, dilation of spatial convs)
_LSKA_CFG = {7: (3, 3, 2), 11: (3, 5, 2), 23: (5, 7, 3),
             35: (5, 11, 3), 41: (5, 13, 3), 53: (5, 17, 3)}


def _shift_flat(v, off):
    """y[..., p] = v[..., p + off], zero-filled outside the flat axis."""
    if off == 0:
        return v
    hw = v.shape[-1]
    if abs(off) >= hw:
        return jnp.zeros_like(v)
    pad = jnp.zeros(v.shape[:-1] + (abs(off),), v.dtype)
    if off > 0:
        return jnp.concatenate([v[..., off:], pad], axis=-1)
    return jnp.concatenate([pad, v[..., :off]], axis=-1)


def _dw_conv_w(v, w_ref, b_ref, k, dil, col, W):
    """Depthwise (1, k) 'same' conv (dilation dil) along W on flat (TN,C,HW)."""
    pad = dil * (k - 1) // 2
    acc = None
    for j in range(k):
        off = j * dil - pad
        if abs(off) >= W:
            continue                         # tap fully outside every row
        tap = _shift_flat(v, off)
        if off > 0:                          # mask row-boundary wrap
            tap = jnp.where(col < (W - off), tap, 0.0)
        elif off < 0:
            tap = jnp.where(col >= (-off), tap, 0.0)
        term = w_ref[j][None] * tap          # (1,C,1) * (TN,C,HW)
        acc = term if acc is None else acc + term
    return acc + b_ref[...][None]


def _dw_conv_h(v, w_ref, b_ref, k, dil, W):
    """Depthwise (k, 1) 'same' conv along H == flat shifts by multiples of W."""
    pad = dil * (k - 1) // 2
    acc = None
    for j in range(k):
        off = (j * dil - pad) * W
        tap = _shift_flat(v, off)            # zero-fill drops whole rows: exact
        term = w_ref[j][None] * tap
        acc = term if acc is None else acc + term
    return acc + b_ref[...][None]


def lska_kernel(x_ref, w0h_ref, b0h_ref, w0v_ref, b0v_ref,
                wsh_ref, bsh_ref, wsv_ref, bsv_ref, w1_ref, b1_ref,
                o_ref, *, W, k0, ks, dil):
    tn, _, hw = x_ref.shape
    x = x_ref[...]                                              # (TN, C, HW)
    col = jax.lax.broadcasted_iota(jnp.int32, (1, 1, hw), 2) % W

    attn = _dw_conv_w(x, w0h_ref, b0h_ref, k0, 1, col, W)       # conv0h
    attn = _dw_conv_h(attn, w0v_ref, b0v_ref, k0, 1, W)         # conv0v
    attn = _dw_conv_w(attn, wsh_ref, bsh_ref, ks, dil, col, W)  # conv_spatial_h
    attn = _dw_conv_h(attn, wsv_ref, bsv_ref, ks, dil, W)       # conv_spatial_v

    w1 = w1_ref[...]                                            # (C, C)
    b1 = b1_ref[...]                                            # (C, 1)
    for n in range(tn):                                         # static unroll
        gate = jnp.dot(w1, attn[n],
                       preferred_element_type=jnp.float32) + b1  # conv1 (1x1)
        o_ref[n] = x[n] * gate                                  # u * attn


def lska(x, params, *, k_size=7):
    n, c, h, w = x.shape
    k0, ks, dil = _LSKA_CFG[k_size]
    hw = h * w
    x_flat = x.reshape(n, c, hw)                 # free, contiguous reshape

    # --- block sizing: several samples per step, keep >=2 grid steps ---
    bytes_per_sample = c * hw * 4
    tn = max(1, min(n, (2 * 1024 * 1024) // max(1, bytes_per_sample)))
    if n >= 2:
        tn = min(tn, max(1, n // 2))             # >=2 steps for 2-TC chips
    while n % tn:
        tn -= 1
    grid = (n // tn,)

    def const_spec(shape):
        nd = len(shape)
        return pl.BlockSpec(shape, lambda i, _nd=nd: (0,) * _nd)

    kernel = functools.partial(lska_kernel, W=w, k0=k0, ks=ks, dil=dil)
    out_flat = pl.pallas_call(
        kernel,
        out_shape=jax.ShapeDtypeStruct((n, c, hw), x.dtype),
        grid=grid,
        in_specs=[
            pl.BlockSpec((tn, c, hw), lambda i: (i, 0, 0)),       # x
            const_spec(params["w0h"].shape), const_spec(params["b0h"].shape),
            const_spec(params["w0v"].shape), const_spec(params["b0v"].shape),
            const_spec(params["wsh"].shape), const_spec(params["bsh"].shape),
            const_spec(params["wsv"].shape), const_spec(params["bsv"].shape),
            const_spec(params["w1"].shape), const_spec(params["b1"].shape),
        ],
        out_specs=pl.BlockSpec((tn, c, hw), lambda i: (i, 0, 0)),
        compiler_params=pltpu.CompilerParams(
            dimension_semantics=("parallel",),
            vmem_limit_bytes=min(48 * 1024 * 1024,
                                 max(32 * 1024 * 1024,
                                     16 * tn * bytes_per_sample))),
    )(x_flat, params["w0h"], params["b0h"], params["w0v"], params["b0v"],
      params["wsh"], params["bsh"], params["wsv"], params["bsv"],
      params["w1"], params["b1"])
    return out_flat.reshape(n, c, h, w)


def lska_ref(x, p, *, k_size=7):
    """Pure-JAX reference matching the PyTorch LSKA forward."""
    k0, ks, dil = _LSKA_CFG[k_size]
    C = x.shape[1]

    def dw(v, wkc1, b, K, d, axis):
        wk = jnp.transpose(wkc1[:, :, 0])            # (C, K)
        pad = d * (K - 1) // 2
        if axis == "w":
            rhs = wk.reshape(C, 1, 1, K)
            padding = ((0, 0), (pad, pad))
            rd = (1, d)
        else:
            rhs = wk.reshape(C, 1, K, 1)
            padding = ((pad, pad), (0, 0))
            rd = (d, 1)
        y = jax.lax.conv_general_dilated(
            v, rhs, window_strides=(1, 1), padding=padding, rhs_dilation=rd,
            dimension_numbers=("NCHW", "OIHW", "NCHW"), feature_group_count=C)
        return y + b[:, 0][None, :, None, None]

    attn = dw(x, p["w0h"], p["b0h"], k0, 1, "w")
    attn = dw(attn, p["w0v"], p["b0v"], k0, 1, "h")
    attn = dw(attn, p["wsh"], p["bsh"], ks, dil, "w")
    attn = dw(attn, p["wsv"], p["bsv"], ks, dil, "h")
    attn = (jnp.einsum("oc,nchw->nohw", p["w1"], attn)
            + p["b1"][:, 0][None, :, None, None])
    return x * attn


def make_params(key, dim, k_size=7):
    k0, ks, dil = _LSKA_CFG[k_size]
    keys = jax.random.split(key, 10)
    s = 0.3

    def rnd(k, shape):
        return s * jax.random.normal(k, shape, jnp.float32)

    return {
        "w0h": rnd(keys[0], (k0, dim, 1)), "b0h": rnd(keys[1], (dim, 1)),
        "w0v": rnd(keys[2], (k0, dim, 1)), "b0v": rnd(keys[3], (dim, 1)),
        "wsh": rnd(keys[4], (ks, dim, 1)), "bsh": rnd(keys[5], (dim, 1)),
        "wsv": rnd(keys[6], (ks, dim, 1)), "bsv": rnd(keys[7], (dim, 1)),
        "w1": rnd(keys[8], (dim, dim)),    "b1": rnd(keys[9], (dim, 1)),
    }


if __name__ == "__main__":
    key = jax.random.PRNGKey(0)
    k_x, k_p = jax.random.split(key)

    N, C, H, W = 2, 8, 16, 16
    K_SIZE = 7
    x = jax.random.normal(k_x, (N, C, H, W), jnp.float32)
    params = make_params(k_p, C, k_size=K_SIZE)

    out = jax.block_until_ready(lska(x, params, k_size=K_SIZE))
    ref = lska_ref(x, params, k_size=K_SIZE)

    assert out.shape == (N, C, H, W)
    err = jnp.max(jnp.abs(out - ref))
    assert jnp.allclose(out, ref, rtol=2e-4, atol=2e-4), f"max abs err {err}"

    print("KERNEL_OK")
</pallas_src>

<mosaic_0001>
module attributes {stable_mosaic.version = 11 : i64} {
  func.func @lska_kernel(%arg0: i32, %arg1: memref<1x8x256xf32, #tpu.memory_space<vmem>>, %arg2: memref<3x8x1xf32, #tpu.memory_space<vmem>>, %arg3: memref<8x1xf32, #tpu.memory_space<vmem>>, %arg4: memref<3x8x1xf32, #tpu.memory_space<vmem>>, %arg5: memref<8x1xf32, #tpu.memory_space<vmem>>, %arg6: memref<3x8x1xf32, #tpu.memory_space<vmem>>, %arg7: memref<8x1xf32, #tpu.memory_space<vmem>>, %arg8: memref<3x8x1xf32, #tpu.memory_space<vmem>>, %arg9: memref<8x1xf32, #tpu.memory_space<vmem>>, %arg10: memref<8x8xf32, #tpu.memory_space<vmem>>, %arg11: memref<8x1xf32, #tpu.memory_space<vmem>>, %arg12: memref<1x8x256xf32, #tpu.memory_space<vmem>>) attributes {dimension_semantics = [#tpu.dimension_semantics<parallel>], iteration_bounds = array<i64: 2>, scalar_prefetch = 0 : i64, scratch_operands = 0 : i64, tpu.core_type = #tpu.core_type<tc>, window_params = [{transform_indices = @transform_0, window_bounds = array<i64: 1, 8, 256>}, {pipeline_mode = #tpu.pipeline_mode<synchronous>, transform_indices = @transform_1, window_bounds = array<i64: 3, 8, 1>}, {pipeline_mode = #tpu.pipeline_mode<synchronous>, transform_indices = @transform_2, window_bounds = array<i64: 8, 1>}, {pipeline_mode = #tpu.pipeline_mode<synchronous>, transform_indices = @transform_3, window_bounds = array<i64: 3, 8, 1>}, {pipeline_mode = #tpu.pipeline_mode<synchronous>, transform_indices = @transform_4, window_bounds = array<i64: 8, 1>}, {pipeline_mode = #tpu.pipeline_mode<synchronous>, transform_indices = @transform_5, window_bounds = array<i64: 3, 8, 1>}, {pipeline_mode = #tpu.pipeline_mode<synchronous>, transform_indices = @transform_6, window_bounds = array<i64: 8, 1>}, {pipeline_mode = #tpu.pipeline_mode<synchronous>, transform_indices = @transform_7, window_bounds = array<i64: 3, 8, 1>}, {pipeline_mode = #tpu.pipeline_mode<synchronous>, transform_indices = @transform_8, window_bounds = array<i64: 8, 1>}, {pipeline_mode = #tpu.pipeline_mode<synchronous>, transform_indices = @transform_9, window_bounds = array<i64: 8, 8>}, {pipeline_mode = #tpu.pipeline_mode<synchronous>, transform_indices = @transform_10, window_bounds = array<i64: 8, 1>}, {transform_indices = @transform_11, window_bounds = array<i64: 1, 8, 256>}]} {
    %c0 = arith.constant 0 : index
    %c0_0 = arith.constant 0 : index
    %c0_1 = arith.constant 0 : index
    %0 = vector.load %arg1[%c0, %c0_0, %c0_1] : memref<1x8x256xf32, #tpu.memory_space<vmem>>, vector<1x8x256xf32>
    %1 = tpu.iota {dimensions = array<i32: 2>} : vector<1x1x256xi32>
    %c16_i32 = arith.constant 16 : i32
    %c0_i32 = arith.constant 0 : i32
    %2 = arith.cmpi eq, %c16_i32, %c0_i32 : i32
    %c1_i32 = arith.constant 1 : i32
    %3 = arith.select %2, %c1_i32, %c16_i32 : i32
    %4 = vector.broadcast %3 : i32 to vector<1x1x256xi32>
    %5 = arith.remsi %1, %4 : vector<1x1x256xi32>
    %c0_i32_2 = arith.constant 0 : i32
    %6 = vector.broadcast %c0_i32_2 : i32 to vector<1x1x256xi32>
    %7 = arith.cmpi ne, %5, %6 : vector<1x1x256xi32>
    %c0_i32_3 = arith.constant 0 : i32
    %8 = vector.broadcast %c0_i32_3 : i32 to vector<1x1x256xi32>
    %9 = arith.cmpi slt, %5, %8 : vector<1x1x256xi32>
    %c0_i32_4 = arith.constant 0 : i32
    %10 = arith.cmpi slt, %3, %c0_i32_4 : i32
    %11 = vector.broadcast %10 : i1 to vector<1x1x256xi1>
    %12 = vector.broadcast %11 : vector<1x1x256xi1> to vector<1x1x256xi1>
    %13 = arith.xori %9, %12 : vector<1x1x256xi1>
    %14 = arith.andi %13, %7 : vector<1x1x256xi1>
    %15 = vector.broadcast %3 : i32 to vector<1x1x256xi32>
    %16 = arith.addi %5, %15 : vector<1x1x256xi32>
    %17 = arith.select %14, %16, %5 : vector<1x1x256xi1>, vector<1x1x256xi32>
    %cst = arith.constant 0.000000e+00 : f32
    %18 = vector.broadcast %cst : f32 to vector<1x8x1xf32>
    %19 = vector.extract_strided_slice %0 {offsets = [0, 0, 0], sizes = [1, 8, 255], strides = [1, 1, 1]} : vector<1x8x256xf32> to vector<1x8x255xf32>
    %20 = tpu.concatenate %18, %19 in 2 : vector<1x8x1xf32>, vector<1x8x255xf32> -> vector<1x8x256xf32>
    %c1_i32_5 = arith.constant 1 : i32
    %21 = vector.broadcast %c1_i32_5 : i32 to vector<1x1x256xi32>
    %22 = arith.cmpi sge, %17, %21 : vector<1x1x256xi32>
    %cst_6 = arith.constant 0.000000e+00 : f32
    %23 = vector.shape_cast %22 : vector<1x1x256xi1> to vector<1x1x256xi1>
    %24 = vector.broadcast %23 : vector<1x1x256xi1> to vector<1x8x256xi1>
    %25 = vector.broadcast %cst_6 : f32 to vector<1x8x256xf32>
    %26 = arith.select %24, %20, %25 : vector<1x8x256xi1>, vector<1x8x256xf32>
    %c0_7 = arith.constant 0 : index
    %c0_8 = arith.constant 0 : index
    %c0_9 = arith.constant 0 : index
    %27 = vector.load %arg2[%c0_7, %c0_8, %c0_9] : memref<3x8x1xf32, #tpu.memory_space<vmem>>, vector<1x8x1xf32>
    %28 = vector.shape_cast %27 : vector<1x8x1xf32> to vector<8x1xf32>
    %29 = vector.shape_cast %28 : vector<8x1xf32> to vector<1x8x1xf32>
    %30 = vector.broadcast %29 : vector<1x8x1xf32> to vector<1x8x256xf32>
    %31 = arith.mulf %30, %26 : vector<1x8x256xf32>
    %c1 = arith.constant 1 : index
    %c0_10 = arith.constant 0 : index
    %c0_11 = arith.constant 0 : index
    %32 = vector.load %arg2[%c1, %c0_10, %c0_11] : memref<3x8x1xf32, #tpu.memory_space<vmem>>, vector<1x8x1xf32>
    %33 = vector.shape_cast %32 : vector<1x8x1xf32> to vector<8x1xf32>
    %34 = vector.shape_cast %33 : vector<8x1xf32> to vector<1x8x1xf32>
    %35 = vector.broadcast %34 : vector<1x8x1xf32> to vector<1x8x256xf32>
    %36 = arith.mulf %35, %0 : vector<1x8x256xf32>
    %37 = arith.addf %31, %36 : vector<1x8x256xf32>
    %cst_12 = arith.constant 0.000000e+00 : f32
    %38 = vector.broadcast %cst_12 : f32 to vector<1x8x1xf32>
    %39 = vector.extract_strided_slice %0 {offsets = [0, 0, 1], sizes = [1, 8, 255], strides = [1, 1, 1]} : vector<1x8x256xf32> to vector<1x8x255xf32>
    %40 = tpu.concatenate %39, %38 in 2 : vector<1x8x255xf32>, vector<1x8x1xf32> -> vector<1x8x256xf32>
    %c15_i32 = arith.constant 15 : i32
    %41 = vector.broadcast %c15_i32 : i32 to vector<1x1x256xi32>
    %42 = arith.cmpi slt, %17, %41 : vector<1x1x256xi32>
    %cst_13 = arith.constant 0.000000e+00 : f32
    %43 = vector.shape_cast %42 : vector<1x1x256xi1> to vector<1x1x256xi1>
    %44 = vector.broadcast %43 : vector<1x1x256xi1> to vector<1x8x256xi1>
    %45 = vector.broadcast %cst_13 : f32 to vector<1x8x256xf32>
    %46 = arith.select %44, %40, %45 : vector<1x8x256xi1>, vector<1x8x256xf32>
    %c2 = arith.constant 2 : index
    %c0_14 = arith.constant 0 : index
    %c0_15 = arith.constant 0 : index
    %47 = vector.load %arg2[%c2, %c0_14, %c0_15] : memref<3x8x1xf32, #tpu.memory_space<vmem>>, vector<1x8x1xf32>
    %48 = vector.shape_cast %47 : vector<1x8x1xf32> to vector<8x1xf32>
    %49 = vector.shape_cast %48 : vector<8x1xf32> to vector<1x8x1xf32>
    %50 = vector.broadcast %49 : vector<1x8x1xf32> to vector<1x8x256xf32>
    %51 = arith.mulf %50, %46 : vector<1x8x256xf32>
    %52 = arith.addf %37, %51 : vector<1x8x256xf32>
    %c0_16 = arith.constant 0 : index
    %c0_17 = arith.constant 0 : index
    %53 = vector.load %arg3[%c0_16, %c0_17] : memref<8x1xf32, #tpu.memory_space<vmem>>, vector<8x1xf32>
    %54 = vector.shape_cast %53 : vector<8x1xf32> to vector<1x8x1xf32>
    %55 = vector.broadcast %54 : vector<1x8x1xf32> to vector<1x8x256xf32>
    %56 = arith.addf %52, %55 : vector<1x8x256xf32>
    %cst_18 = arith.constant 0.000000e+00 : f32
    %57 = vector.broadcast %cst_18 : f32 to vector<1x8x16xf32>
    %58 = vector.extract_strided_slice %56 {offsets = [0, 0, 0], sizes = [1, 8, 240], strides = [1, 1, 1]} : vector<1x8x256xf32> to vector<1x8x240xf32>
    %59 = tpu.concatenate %57, %58 in 2 : vector<1x8x16xf32>, vector<1x8x240xf32> -> vector<1x8x256xf32>
    %c0_19 = arith.constant 0 : index
    %c0_20 = arith.constant 0 : index
    %c0_21 = arith.constant 0 : index
    %60 = vector.load %arg4[%c0_19, %c0_20, %c0_21] : memref<3x8x1xf32, #tpu.memory_space<vmem>>, vector<1x8x1xf32>
    %61 = vector.shape_cast %60 : vector<1x8x1xf32> to vector<8x1xf32>
    %62 = vector.shape_cast %61 : vector<8x1xf32> to vector<1x8x1xf32>
    %63 = vector.broadcast %62 : vector<1x8x1xf32> to vector<1x8x256xf32>
    %64 = arith.mulf %63, %59 : vector<1x8x256xf32>
    %c1_22 = arith.constant 1 : index
    %c0_23 = arith.constant 0 : index
    %c0_24 = arith.constant 0 : index
    %65 = vector.load %arg4[%c1_22, %c0_23, %c0_24] : memref<3x8x1xf32, #tpu.memory_space<vmem>>, vector<1x8x1xf32>
    %66 = vector.shape_cast %65 : vector<1x8x1xf32> to vector<8x1xf32>
    %67 = vector.shape_cast %66 : vector<8x1xf32> to vector<1x8x1xf32>
    %68 = vector.broadcast %67 : vector<1x8x1xf32> to vector<1x8x256xf32>
    %69 = arith.mulf %68, %56 : vector<1x8x256xf32>
    %70 = arith.addf %64, %69 : vector<1x8x256xf32>
    %cst_25 = arith.constant 0.000000e+00 : f32
    %71 = vector.broadcast %cst_25 : f32 to vector<1x8x16xf32>
    %72 = vector.extract_strided_slice %56 {offsets = [0, 0, 16], sizes = [1, 8, 240], strides = [1, 1, 1]} : vector<1x8x256xf32> to vector<1x8x240xf32>
    %73 = tpu.concatenate %72, %71 in 2 : vector<1x8x240xf32>, vector<1x8x16xf32> -> vector<1x8x256xf32>
    %c2_26 = arith.constant 2 : index
    %c0_27 = arith.constant 0 : index
    %c0_28 = arith.constant 0 : index
    %74 = vector.load %arg4[%c2_26, %c0_27, %c0_28] : memref<3x8x1xf32, #tpu.memory_space<vmem>>, vector<1x8x1xf32>
    %75 = vector.shape_cast %74 : vector<1x8x1xf32> to vector<8x1xf32>
    %76 = vector.shape_cast %75 : vector<8x1xf32> to vector<1x8x1xf32>
    %77 = vector.broadcast %76 : vector<1x8x1xf32> to vector<1x8x256xf32>
    %78 = arith.mulf %77, %73 : vector<1x8x256xf32>
    %79 = arith.addf %70, %78 : vector<1x8x256xf32>
    %c0_29 = arith.constant 0 : index
    %c0_30 = arith.constant 0 : index
    %80 = vector.load %arg5[%c0_29, %c0_30] : memref<8x1xf32, #tpu.memory_space<vmem>>, vector<8x1xf32>
    %81 = vector.shape_cast %80 : vector<8x1xf32> to vector<1x8x1xf32>
    %82 = vector.broadcast %81 : vector<1x8x1xf32> to vector<1x8x256xf32>
    %83 = arith.addf %79, %82 : vector<1x8x256xf32>
    %cst_31 = arith.constant 0.000000e+00 : f32
    %84 = vector.broadcast %cst_31 : f32 to vector<1x8x2xf32>
    %85 = vector.extract_strided_slice %83 {offsets = [0, 0, 0], sizes = [1, 8, 254], strides = [1, 1, 1]} : vector<1x8x256xf32> to vector<1x8x254xf32>
    %86 = tpu.concatenate %84, %85 in 2 : vector<1x8x2xf32>, vector<1x8x254xf32> -> vector<1x8x256xf32>
    %c2_i32 = arith.constant 2 : i32
    %87 = vector.broadcast %c2_i32 : i32 to vector<1x1x256xi32>
    %88 = arith.cmpi sge, %17, %87 : vector<1x1x256xi32>
    %cst_32 = arith.constant 0.000000e+00 : f32
    %89 = vector.shape_cast %88 : vector<1x1x256xi1> to vector<1x1x256xi1>
    %90 = vector.broadcast %89 : vector<1x1x256xi1> to vector<1x8x256xi1>
    %91 = vector.broadcast %cst_32 : f32 to vector<1x8x256xf32>
    %92 = arith.select %90, %86, %91 : vector<1x8x256xi1>, vector<1x8x256xf32>
    %c0_33 = arith.constant 0 : index
    %c0_34 = arith.constant 0 : index
    %c0_35 = arith.constant 0 : index
    %93 = vector.load %arg6[%c0_33, %c0_34, %c0_35] : memref<3x8x1xf32, #tpu.memory_space<vmem>>, vector<1x8x1xf32>
    %94 = vector.shape_cast %93 : vector<1x8x1xf32> to vector<8x1xf32>
    %95 = vector.shape_cast %94 : vector<8x1xf32> to vector<1x8x1xf32>
    %96 = vector.broadcast %95 : vector<1x8x1xf32> to vector<1x8x256xf32>
    %97 = arith.mulf %96, %92 : vector<1x8x256xf32>
    %c1_36 = arith.constant 1 : index
    %c0_37 = arith.constant 0 : index
    %c0_38 = arith.constant 0 : index
    %98 = vector.load %arg6[%c1_36, %c0_37, %c0_38] : memref<3x8x1xf32, #tpu.memory_space<vmem>>, vector<1x8x1xf32>
    %99 = vector.shape_cast %98 : vector<1x8x1xf32> to vector<8x1xf32>
    %100 = vector.shape_cast %99 : vector<8x1xf32> to vector<1x8x1xf32>
    %101 = vector.broadcast %100 : vector<1x8x1xf32> to vector<1x8x256xf32>
    %102 = arith.mulf %101, %83 : vector<1x8x256xf32>
    %103 = arith.addf %97, %102 : vector<1x8x256xf32>
    %cst_39 = arith.constant 0.000000e+00 : f32
    %104 = vector.broadcast %cst_39 : f32 to vector<1x8x2xf32>
    %105 = vector.extract_strided_slice %83 {offsets = [0, 0, 2], sizes = [1, 8, 254], strides = [1, 1, 1]} : vector<1x8x256xf32> to vector<1x8x254xf32>
    %106 = tpu.concatenate %105, %104 in 2 : vector<1x8x254xf32>, vector<1x8x2xf32> -> vector<1x8x256xf32>
    %c14_i32 = arith.constant 14 : i32
    %107 = vector.broadcast %c14_i32 : i32 to vector<1x1x256xi32>
    %108 = arith.cmpi slt, %17, %107 : vector<1x1x256xi32>
    %cst_40 = arith.constant 0.000000e+00 : f32
    %109 = vector.shape_cast %108 : vector<1x1x256xi1> to vector<1x1x256xi1>
    %110 = vector.broadcast %109 : vector<1x1x256xi1> to vector<1x8x256xi1>
    %111 = vector.broadcast %cst_40 : f32 to vector<1x8x256xf32>
    %112 = arith.select %110, %106, %111 : vector<1x8x256xi1>, vector<1x8x256xf32>
    %c2_41 = arith.constant 2 : index
    %c0_42 = arith.constant 0 : index
    %c0_43 = arith.constant 0 : index
    %113 = vector.load %arg6[%c2_41, %c0_42, %c0_43] : memref<3x8x1xf32, #tpu.memory_space<vmem>>, vector<1x8x1xf32>
    %114 = vector.shape_cast %113 : vector<1x8x1xf32> to vector<8x1xf32>
    %115 = vector.shape_cast %114 : vector<8x1xf32> to vector<1x8x1xf32>
    %116 = vector.broadcast %115 : vector<1x8x1xf32> to vector<1x8x256xf32>
    %117 = arith.mulf %116, %112 : vector<1x8x256xf32>
    %118 = arith.addf %103, %117 : vector<1x8x256xf32>
    %c0_44 = arith.constant 0 : index
    %c0_45 = arith.constant 0 : index
    %119 = vector.load %arg7[%c0_44, %c0_45] : memref<8x1xf32, #tpu.memory_space<vmem>>, vector<8x1xf32>
    %120 = vector.shape_cast %119 : vector<8x1xf32> to vector<1x8x1xf32>
    %121 = vector.broadcast %120 : vector<1x8x1xf32> to vector<1x8x256xf32>
    %122 = arith.addf %118, %121 : vector<1x8x256xf32>
    %cst_46 = arith.constant 0.000000e+00 : f32
    %123 = vector.broadcast %cst_46 : f32 to vector<1x8x32xf32>
    %124 = vector.extract_strided_slice %122 {offsets = [0, 0, 0], sizes = [1, 8, 224], strides = [1, 1, 1]} : vector<1x8x256xf32> to vector<1x8x224xf32>
    %125 = tpu.concatenate %123, %124 in 2 : vector<1x8x32xf32>, vector<1x8x224xf32> -> vector<1x8x256xf32>
    %c0_47 = arith.constant 0 : index
    %c0_48 = arith.constant 0 : index
    %c0_49 = arith.constant 0 : index
    %126 = vector.load %arg8[%c0_47, %c0_48, %c0_49] : memref<3x8x1xf32, #tpu.memory_space<vmem>>, vector<1x8x1xf32>
    %127 = vector.shape_cast %126 : vector<1x8x1xf32> to vector<8x1xf32>
    %128 = vector.shape_cast %127 : vector<8x1xf32> to vector<1x8x1xf32>
    %129 = vector.broadcast %128 : vector<1x8x1xf32> to vector<1x8x256xf32>
    %130 = arith.mulf %129, %125 : vector<1x8x256xf32>
    %c1_50 = arith.constant 1 : index
    %c0_51 = arith.constant 0 : index
    %c0_52 = arith.constant 0 : index
    %131 = vector.load %arg8[%c1_50, %c0_51, %c0_52] : memref<3x8x1xf32, #tpu.memory_space<vmem>>, vector<1x8x1xf32>
    %132 = vector.shape_cast %131 : vector<1x8x1xf32> to vector<8x1xf32>
    %133 = vector.shape_cast %132 : vector<8x1xf32> to vector<1x8x1xf32>
    %134 = vector.broadcast %133 : vector<1x8x1xf32> to vector<1x8x256xf32>
    %135 = arith.mulf %134, %122 : vector<1x8x256xf32>
    %136 = arith.addf %130, %135 : vector<1x8x256xf32>
    %cst_53 = arith.constant 0.000000e+00 : f32
    %137 = vector.broadcast %cst_53 : f32 to vector<1x8x32xf32>
    %138 = vector.extract_strided_slice %122 {offsets = [0, 0, 32], sizes = [1, 8, 224], strides = [1, 1, 1]} : vector<1x8x256xf32> to vector<1x8x224xf32>
    %139 = tpu.concatenate %138, %137 in 2 : vector<1x8x224xf32>, vector<1x8x32xf32> -> vector<1x8x256xf32>
    %c2_54 = arith.constant 2 : index
    %c0_55 = arith.constant 0 : index
    %c0_56 = arith.constant 0 : index
    %140 = vector.load %arg8[%c2_54, %c0_55, %c0_56] : memref<3x8x1xf32, #tpu.memory_space<vmem>>, vector<1x8x1xf32>
    %141 = vector.shape_cast %140 : vector<1x8x1xf32> to vector<8x1xf32>
    %142 = vector.shape_cast %141 : vector<8x1xf32> to vector<1x8x1xf32>
    %143 = vector.broadcast %142 : vector<1x8x1xf32> to vector<1x8x256xf32>
    %144 = arith.mulf %143, %139 : vector<1x8x256xf32>
    %145 = arith.addf %136, %144 : vector<1x8x256xf32>
    %c0_57 = arith.constant 0 : index
    %c0_58 = arith.constant 0 : index
    %146 = vector.load %arg9[%c0_57, %c0_58] : memref<8x1xf32, #tpu.memory_space<vmem>>, vector<8x1xf32>
    %147 = vector.shape_cast %146 : vector<8x1xf32> to vector<1x8x1xf32>
    %148 = vector.broadcast %147 : vector<1x8x1xf32> to vector<1x8x256xf32>
    %149 = arith.addf %145, %148 : vector<1x8x256xf32>
    %c0_59 = arith.constant 0 : index
    %c0_60 = arith.constant 0 : index
    %150 = vector.load %arg10[%c0_59, %c0_60] : memref<8x8xf32, #tpu.memory_space<vmem>>, vector<8x8xf32>
    %c0_61 = arith.constant 0 : index
    %c0_62 = arith.constant 0 : index
    %151 = vector.load %arg11[%c0_61, %c0_62] : memref<8x1xf32, #tpu.memory_space<vmem>>, vector<8x1xf32>
    %152 = vector.shape_cast %149 : vector<1x8x256xf32> to vector<8x256xf32>
    %cst_63 = arith.constant dense<0.000000e+00> : vector<8x256xf32>
    %153 = tpu.matmul %150, %152, %cst_63 {dimension_numbers = #tpu.dot_dimension_numbers<[1], [0], [0], [1], [0, 0, 1, 1], [], []>} : vector<8x8xf32>, vector<8x256xf32>, vector<8x256xf32> -> vector<8x256xf32>
    %154 = vector.broadcast %151 : vector<8x1xf32> to vector<8x256xf32>
    %155 = arith.addf %153, %154 : vector<8x256xf32>
    %156 = vector.shape_cast %0 : vector<1x8x256xf32> to vector<8x256xf32>
    %157 = arith.mulf %156, %155 : vector<8x256xf32>
    %c0_64 = arith.constant 0 : index
    %c0_65 = arith.constant 0 : index
    %c0_66 = arith.constant 0 : index
    %158 = vector.load %arg12[%c0_64, %c0_65, %c0_66] : memref<1x8x256xf32, #tpu.memory_space<vmem>>, vector<1x8x256xf32>
    %159 = vector.shape_cast %158 : vector<1x8x256xf32> to vector<8x256xf32>
    %160 = vector.shape_cast %157 : vector<8x256xf32> to vector<1x8x256xf32>
    tpu.vector_store %arg12[%c0_64, %c0_65, %c0_66], %160 {strides = array<i32>} : memref<1x8x256xf32, #tpu.memory_space<vmem>>, vector<1x8x256xf32>,
    return
  }
  func.func @transform_0(%arg0: i32) -> (i32, i32, i32) {
    %c0_i32 = arith.constant 0 : i32
    %c0_i32_0 = arith.constant 0 : i32
    %c0_i32_1 = arith.constant 0 : i32
    return %arg0, %c0_i32, %c0_i32_0 : i32, i32, i32
  }
  func.func @transform_1(%arg0: i32) -> (i32, i32, i32) {
    %c0_i32 = arith.constant 0 : i32
    %c0_i32_0 = arith.constant 0 : i32
    %c0_i32_1 = arith.constant 0 : i32
    %c0_i32_2 = arith.constant 0 : i32
    return %c0_i32, %c0_i32_0, %c0_i32_1 : i32, i32, i32
  }
  func.func @transform_2(%arg0: i32) -> (i32, i32) {
    %c0_i32 = arith.constant 0 : i32
    %c0_i32_0 = arith.constant 0 : i32
    %c0_i32_1 = arith.constant 0 : i32
    return %c0_i32, %c0_i32_0 : i32, i32
  }
  func.func @transform_3(%arg0: i32) -> (i32, i32, i32) {
    %c0_i32 = arith.constant 0 : i32
    %c0_i32_0 = arith.constant 0 : i32
    %c0_i32_1 = arith.constant 0 : i32
    %c0_i32_2 = arith.constant 0 : i32
    return %c0_i32, %c0_i32_0, %c0_i32_1 : i32, i32, i32
  }
  func.func @transform_4(%arg0: i32) -> (i32, i32) {
    %c0_i32 = arith.constant 0 : i32
    %c0_i32_0 = arith.constant 0 : i32
    %c0_i32_1 = arith.constant 0 : i32
    return %c0_i32, %c0_i32_0 : i32, i32
  }
  func.func @transform_5(%arg0: i32) -> (i32, i32, i32) {
    %c0_i32 = arith.constant 0 : i32
    %c0_i32_0 = arith.constant 0 : i32
    %c0_i32_1 = arith.constant 0 : i32
    %c0_i32_2 = arith.constant 0 : i32
    return %c0_i32, %c0_i32_0, %c0_i32_1 : i32, i32, i32
  }
  func.func @transform_6(%arg0: i32) -> (i32, i32) {
    %c0_i32 = arith.constant 0 : i32
    %c0_i32_0 = arith.constant 0 : i32
    %c0_i32_1 = arith.constant 0 : i32
    return %c0_i32, %c0_i32_0 : i32, i32
  }
  func.func @transform_7(%arg0: i32) -> (i32, i32, i32) {
    %c0_i32 = arith.constant 0 : i32
    %c0_i32_0 = arith.constant 0 : i32
    %c0_i32_1 = arith.constant 0 : i32
    %c0_i32_2 = arith.constant 0 : i32
    return %c0_i32, %c0_i32_0, %c0_i32_1 : i32, i32, i32
  }
  func.func @transform_8(%arg0: i32) -> (i32, i32) {
    %c0_i32 = arith.constant 0 : i32
    %c0_i32_0 = arith.constant 0 : i32
    %c0_i32_1 = arith.constant 0 : i32
    return %c0_i32, %c0_i32_0 : i32, i32
  }
  func.func @transform_9(%arg0: i32) -> (i32, i32) {
    %c0_i32 = arith.constant 0 : i32
    %c0_i32_0 = arith.constant 0 : i32
    %c0_i32_1 = arith.constant 0 : i32
    return %c0_i32, %c0_i32_0 : i32, i32
  }
  func.func @transform_10(%arg0: i32) -> (i32, i32) {
    %c0_i32 = arith.constant 0 : i32
    %c0_i32_0 = arith.constant 0 : i32
    %c0_i32_1 = arith.constant 0 : i32
    return %c0_i32, %c0_i32_0 : i32, i32
  }
  func.func @transform_11(%arg0: i32) -> (i32, i32, i32) {
    %c0_i32 = arith.constant 0 : i32
    %c0_i32_0 = arith.constant 0 : i32
    %c0_i32_1 = arith.constant 0 : i32
    return %arg0, %c0_i32, %c0_i32_0 : i32, i32, i32
  }
}

</mosaic_0001>

<llo_original>
// kernel: tpu_custom_call.1
$region0: #{tpu_custom_call.1}
  #allocation0 [shape = 'u32[]', space=smem, size = 0x4, offset = 0x4, fixed_abs, tag = 'smem constant byte address 0x4 - core index']
  #allocation1 [shape = 'u32[72,128]{1,0:T(1,128)}', space=vmem, size = 0x9000, scoped, tag = 'internal scratch']
  %s0 = inlined_call_operand.vmem [shape: f32[2,8,256], index: 0, kind: input, shape index: {}]
  %s1 = inlined_call_operand.vmem [shape: f32[3,8,1], index: 1, kind: input, shape index: {}]
  %s2 = inlined_call_operand.vmem [shape: f32[8,1], index: 2, kind: input, shape index: {}]
  %s3 = inlined_call_operand.vmem [shape: f32[3,8,1], index: 3, kind: input, shape index: {}]
  %s4 = inlined_call_operand.vmem [shape: f32[8,1], index: 4, kind: input, shape index: {}]
  %s5 = inlined_call_operand.vmem [shape: f32[3,8,1], index: 5, kind: input, shape index: {}]
  %s6 = inlined_call_operand.vmem [shape: f32[8,1], index: 6, kind: input, shape index: {}]
  %s7 = inlined_call_operand.vmem [shape: f32[3,8,1], index: 7, kind: input, shape index: {}]
  %s8 = inlined_call_operand.vmem [shape: f32[8,1], index: 8, kind: input, shape index: {}]
  %s9 = inlined_call_operand.vmem [shape: f32[8,8], index: 9, kind: input, shape index: {}]
  %s10 = inlined_call_operand.vmem [shape: f32[8,1], index: 10, kind: input, shape index: {}]
  %s11 = inlined_call_operand.hbm [shape: f32[2,8,256], index: 11, kind: output, shape index: {}]
  %s12 = sld [smem:[#allocation0]]
  $region77: #{tpu_custom_call.1} parent=0
    _
  %s14 = ssub.s32 1, %s12
  %s15 = scalar_select 0, %s14, %s12
  $region1: #{tpu_custom_call.1} parent=0
    #allocation2 [shape = 'u8[16384]{0}', space=vmem, size = 0x4000, scoped, tag = 'output window, operand 0']
    #allocation3 [shape = 's32[2]{0}', space=sflag, size = 0x8, scoped, tag = 'scoped memory for tpu_custom_call.1']
    %16 = vsyncpa [#allocation3], 0
    %s17 = scalar_lea.sflag [#allocation3], 1
    %18 = vsyncpa %s17, 0
    loop: start=0, step=1, limit=4
    $region2: #{tpu_custom_call.1} parent=1 // loop_pre_header
      _
    $region3: #{tpu_custom_call.1} parent=1 // loop_header
      %s20 = sphi 0, %s24
      %p21 = scmp.ge.s32.totalorder %s20, 4
      %s30 = sphi 0, %s32
      %s33 = sphi 0, %s30
      %s34 = sphi 0, %s33
      %s50 = sphi 0, %s34
      %s54 = sphi 0, %s54
      %s56 = sphi 0, %s54
      %s57 = sphi 0, %s56
      %s71 = sphi 0, %s57
      %s75 = sphi 0, %s75
      %s77 = sphi 0, %s75
      %s78 = sphi 0, %s77
      %s92 = sphi 0, %s78
      %s96 = sphi 0, %s96
      %s98 = sphi 0, %s96
      %s99 = sphi 0, %s98
      %s113 = sphi 0, %s99
      %s117 = sphi 0, %s117
      %s119 = sphi 0, %s117
      %s120 = sphi 0, %s119
      %s134 = sphi 0, %s120
      %s138 = sphi 0, %s138
      %s140 = sphi 0, %s138
      %s141 = sphi 0, %s140
      %s155 = sphi 0, %s141
      %s159 = sphi 0, %s159
      %s161 = sphi 0, %s159
      %s162 = sphi 0, %s161
      %s176 = sphi 0, %s162
      %s180 = sphi 0, %s180
      %s182 = sphi 0, %s180
      %s183 = sphi 0, %s182
      %s197 = sphi 0, %s183
      %s201 = sphi 0, %s201
      %s203 = sphi 0, %s201
      %s204 = sphi 0, %s203
      %s218 = sphi 0, %s204
      %s222 = sphi 0, %s222
      %s224 = sphi 0, %s222
      %s225 = sphi 0, %s224
      %s239 = sphi 0, %s225
      %s243 = sphi 0, %s243
      %s245 = sphi 0, %s243
      %s246 = sphi 0, %s245
      %s260 = sphi 0, %s246
      %s266 = sphi 0, %s268
      %s269 = sphi 0, %s266
      %s270 = sphi 0, %s269
      %s286 = sphi 0, %s270
    $region4: #{tpu_custom_call.1} parent=1 // loop_header_branch
      %23 = sbr.rel (%p21) target = $region8
    $region5: #{tpu_custom_call.1} parent=1 // loop_body
      %s25 = ssub.s32 %s20, 1
      %s26 = ssub.s32 %s20, 2
      %s27 = sadd.s32 %s20, 1
      %s28 = ssub.s32 %s20, %s27
      %p29 = scmp.eq.s32.totalorder %s28, 0
      %s31 = sadd.s32 %s30, 1
      %s32 = scalar_select %p29, %s30, %s31
      %p35 = pneg %p29
      %p36 = scmp.eq.s32.totalorder %s20, 1
      %p37 = por %p35, %p36
      %p38 = scmp.ne.s32.totalorder %s30, %s33
      %p39 = scmp.eq.s32.totalorder %s20, 0
      %p40 = por %p38, %p39
      %p41 = scmp.ne.s32.totalorder %s30, %s33
      %p42 = scmp.eq.s32.totalorder %s25, 1
      %p43 = por %p41, %p42
      %p44 = scmp.ne.s32.totalorder %s33, %s34
      %p45 = scmp.eq.s32.totalorder %s25, 0
      %p46 = por %p44, %p45
      %p47 = scmp.ne.s32.totalorder %s33, %s34
      %p48 = scmp.eq.s32.totalorder %s26, 1
      %p49 = por %p47, %p48
      %p51 = scmp.ne.s32.totalorder %s34, %s50
      %p52 = scmp.eq.s32.totalorder %s26, 0
      %p53 = por %p51, %p52
      %s55 = sadd.s32 %s54, 1
      %p58 = scmp.eq.s32.totalorder %s20, 1
      %p59 = scmp.ne.s32.totalorder %s54, %s56
      %p60 = scmp.eq.s32.totalorder %s20, 0
      %p61 = por %p59, %p60
      %p62 = scmp.ne.s32.totalorder %s54, %s56
      %p63 = scmp.eq.s32.totalorder %s25, 1
      %p64 = por %p62, %p63
      %p65 = scmp.ne.s32.totalorder %s56, %s57
      %p66 = scmp.eq.s32.totalorder %s25, 0
      %p67 = por %p65, %p66
      %p68 = scmp.ne.s32.totalorder %s56, %s57
      %p69 = scmp.eq.s32.totalorder %s26, 1
      %p70 = por %p68, %p69
      %p72 = scmp.ne.s32.totalorder %s57, %s71
      %p73 = scmp.eq.s32.totalorder %s26, 0
      %p74 = por %p72, %p73
      %s76 = sadd.s32 %s75, 1
      %p79 = scmp.eq.s32.totalorder %s20, 1
      %p80 = scmp.ne.s32.totalorder %s75, %s77
      %p81 = scmp.eq.s32.totalorder %s20, 0
      %p82 = por %p80, %p81
      %p83 = scmp.ne.s32.totalorder %s75, %s77
      %p84 = scmp.eq.s32.totalorder %s25, 1
      %p85 = por %p83, %p84
      %p86 = scmp.ne.s32.totalorder %s77, %s78
      %p87 = scmp.eq.s32.totalorder %s25, 0
      %p88 = por %p86, %p87
      %p89 = scmp.ne.s32.totalorder %s77, %s78
      %p90 = scmp.eq.s32.totalorder %s26, 1
      %p91 = por %p89, %p90
      %p93 = scmp.ne.s32.totalorder %s78, %s92
      %p94 = scmp.eq.s32.totalorder %s26, 0
      %p95 = por %p93, %p94
      %s97 = sadd.s32 %s96, 1
      %p100 = scmp.eq.s32.totalorder %s20, 1
      %p101 = scmp.ne.s32.totalorder %s96, %s98
      %p102 = scmp.eq.s32.totalorder %s20, 0
      %p103 = por %p101, %p102
      %p104 = scmp.ne.s32.totalorder %s96, %s98
      %p105 = scmp.eq.s32.totalorder %s25, 1
      %p106 = por %p104, %p105
      %p107 = scmp.ne.s32.totalorder %s98, %s99
      %p108 = scmp.eq.s32.totalorder %s25, 0
      %p109 = por %p107, %p108
      %p110 = scmp.ne.s32.totalorder %s98, %s99
      %p111 = scmp.eq.s32.totalorder %s26, 1
      %p112 = por %p110, %p111
      %p114 = scmp.ne.s32.totalorder %s99, %s113
      %p115 = scmp.eq.s32.totalorder %s26, 0
      %p116 = por %p114, %p115
      %s118 = sadd.s32 %s117, 1
      %p121 = scmp.eq.s32.totalorder %s20, 1
      %p122 = scmp.ne.s32.totalorder %s117, %s119
      %p123 = scmp.eq.s32.totalorder %s20, 0
      %p124 = por %p122, %p123
      %p125 = scmp.ne.s32.totalorder %s117, %s119
      %p126 = scmp.eq.s32.totalorder %s25, 1
      %p127 = por %p125, %p126
      %p128 = scmp.ne.s32.totalorder %s119, %s120
      %p129 = scmp.eq.s32.totalorder %s25, 0
      %p130 = por %p128, %p129
      %p131 = scmp.ne.s32.totalorder %s119, %s120
      %p132 = scmp.eq.s32.totalorder %s26, 1
      %p133 = por %p131, %p132
      %p135 = scmp.ne.s32.totalorder %s120, %s134
      %p136 = scmp.eq.s32.totalorder %s26, 0
      %p137 = por %p135, %p136
      %s139 = sadd.s32 %s138, 1
      %p142 = scmp.eq.s32.totalorder %s20, 1
      %p143 = scmp.ne.s32.totalorder %s138, %s140
      %p144 = scmp.eq.s32.totalorder %s20, 0
      %p145 = por %p143, %p144
      %p146 = scmp.ne.s32.totalorder %s138, %s140
      %p147 = scmp.eq.s32.totalorder %s25, 1
      %p148 = por %p146, %p147
      %p149 = scmp.ne.s32.totalorder %s140, %s141
      %p150 = scmp.eq.s32.totalorder %s25, 0
      %p151 = por %p149, %p150
      %p152 = scmp.ne.s32.totalorder %s140, %s141
      %p153 = scmp.eq.s32.totalorder %s26, 1
      %p154 = por %p152, %p153
      %p156 = scmp.ne.s32.totalorder %s141, %s155
      %p157 = scmp.eq.s32.totalorder %s26, 0
      %p158 = por %p156, %p157
      %s160 = sadd.s32 %s159, 1
      %p163 = scmp.eq.s32.totalorder %s20, 1
      %p164 = scmp.ne.s32.totalorder %s159, %s161
      %p165 = scmp.eq.s32.totalorder %s20, 0
      %p166 = por %p164, %p165
      %p167 = scmp.ne.s32.totalorder %s159, %s161
      %p168 = scmp.eq.s32.totalorder %s25, 1
      %p169 = por %p167, %p168
      %p170 = scmp.ne.s32.totalorder %s161, %s162
      %p171 = scmp.eq.s32.totalorder %s25, 0
      %p172 = por %p170, %p171
      %p173 = scmp.ne.s32.totalorder %s161, %s162
      %p174 = scmp.eq.s32.totalorder %s26, 1
      %p175 = por %p173, %p174
      %p177 = scmp.ne.s32.totalorder %s162, %s176
      %p178 = scmp.eq.s32.totalorder %s26, 0
      %p179 = por %p177, %p178
      %s181 = sadd.s32 %s180, 1
      %p184 = scmp.eq.s32.totalorder %s20, 1
      %p185 = scmp.ne.s32.totalorder %s180, %s182
      %p186 = scmp.eq.s32.totalorder %s20, 0
      %p187 = por %p185, %p186
      %p188 = scmp.ne.s32.totalorder %s180, %s182
      %p189 = scmp.eq.s32.totalorder %s25, 1
      %p190 = por %p188, %p189
      %p191 = scmp.ne.s32.totalorder %s182, %s183
      %p192 = scmp.eq.s32.totalorder %s25, 0
      %p193 = por %p191, %p192
      %p194 = scmp.ne.s32.totalorder %s182, %s183
      %p195 = scmp.eq.s32.totalorder %s26, 1
      %p196 = por %p194, %p195
      %p198 = scmp.ne.s32.totalorder %s183, %s197
      %p199 = scmp.eq.s32.totalorder %s26, 0
      %p200 = por %p198, %p199
      %s202 = sadd.s32 %s201, 1
      %p205 = scmp.eq.s32.totalorder %s20, 1
      %p206 = scmp.ne.s32.totalorder %s201, %s203
      %p207 = scmp.eq.s32.totalorder %s20, 0
      %p208 = por %p206, %p207
      %p209 = scmp.ne.s32.totalorder %s201, %s203
      %p210 = scmp.eq.s32.totalorder %s25, 1
      %p211 = por %p209, %p210
      %p212 = scmp.ne.s32.totalorder %s203, %s204
      %p213 = scmp.eq.s32.totalorder %s25, 0
      %p214 = por %p212, %p213
      %p215 = scmp.ne.s32.totalorder %s203, %s204
      %p216 = scmp.eq.s32.totalorder %s26, 1
      %p217 = por %p215, %p216
      %p219 = scmp.ne.s32.totalorder %s204, %s218
      %p220 = scmp.eq.s32.totalorder %s26, 0
      %p221 = por %p219, %p220
      %s223 = sadd.s32 %s222, 1
      %p226 = scmp.eq.s32.totalorder %s20, 1
      %p227 = scmp.ne.s32.totalorder %s222, %s224
      %p228 = scmp.eq.s32.totalorder %s20, 0
      %p229 = por %p227, %p228
      %p230 = scmp.ne.s32.totalorder %s222, %s224
      %p231 = scmp.eq.s32.totalorder %s25, 1
      %p232 = por %p230, %p231
      %p233 = scmp.ne.s32.totalorder %s224, %s225
      %p234 = scmp.eq.s32.totalorder %s25, 0
      %p235 = por %p233, %p234
      %p236 = scmp.ne.s32.totalorder %s224, %s225
      %p237 = scmp.eq.s32.totalorder %s26, 1
      %p238 = por %p236, %p237
      %p240 = scmp.ne.s32.totalorder %s225, %s239
      %p241 = scmp.eq.s32.totalorder %s26, 0
      %p242 = por %p240, %p241
      %s244 = sadd.s32 %s243, 1
      %p247 = scmp.eq.s32.totalorder %s20, 1
      %p248 = scmp.ne.s32.totalorder %s243, %s245
      %p249 = scmp.eq.s32.totalorder %s20, 0
      %p250 = por %p248, %p249
      %p251 = scmp.ne.s32.totalorder %s243, %s245
      %p252 = scmp.eq.s32.totalorder %s25, 1
      %p253 = por %p251, %p252
      %p254 = scmp.ne.s32.totalorder %s245, %s246
      %p255 = scmp.eq.s32.totalorder %s25, 0
      %p256 = por %p254, %p255
      %p257 = scmp.ne.s32.totalorder %s245, %s246
      %p258 = scmp.eq.s32.totalorder %s26, 1
      %p259 = por %p257, %p258
      %p261 = scmp.ne.s32.totalorder %s246, %s260
      %p262 = scmp.eq.s32.totalorder %s26, 0
      %p263 = por %p261, %p262
      %s264 = ssub.s32 %s20, %s27
      %p265 = scmp.eq.s32.totalorder %s264, 0
      %s267 = sadd.s32 %s266, 1
      %s268 = scalar_select %p265, %s266, %s267
      %p271 = pneg %p265
      %p272 = scmp.eq.s32.totalorder %s20, 1
      %p273 = por %p271, %p272
      %p274 = scmp.ne.s32.totalorder %s266, %s269
      %p275 = scmp.eq.s32.totalorder %s20, 0
      %p276 = por %p274, %p275
      %p277 = scmp.ne.s32.totalorder %s266, %s269
      %p278 = scmp.eq.s32.totalorder %s25, 1
      %p279 = por %p277, %p278
      %p280 = scmp.ne.s32.totalorder %s269, %s270
      %p281 = scmp.eq.s32.totalorder %s25, 0
      %p282 = por %p280, %p281
      %p283 = scmp.ne.s32.totalorder %s269, %s270
      %p284 = scmp.eq.s32.totalorder %s26, 1
      %p285 = por %p283, %p284
      %p287 = scmp.ne.s32.totalorder %s270, %s286
      %p288 = scmp.eq.s32.totalorder %s26, 0
      %p289 = por %p287, %p288
      %p290 = scmp.le.s32.totalorder 1, %s20
      %p291 = scmp.lt.s32.totalorder %s20, 3
      %p292 = pnand %p290, %p291
      %p293 = pneg %p292
      // Predicated region
      $region9: #{tpu_custom_call.1} parent=5 // pred_check
        _
      $region10: #{tpu_custom_call.1} parent=5 // pred_check_branch
        %295 = sbr.rel (%p292) target = $region12
      $region11: #{tpu_custom_call.1} parent=5 // pred_region
        %s296 = ssub.s32 %s20, 1
        // Predicated region
        $region13: #{tpu_custom_call.1} parent=11 // pred_check
          %p297 = pneg %p67
        $region14: #{tpu_custom_call.1} parent=11 // pred_check_branch
          %299 = sbr.rel (%p297) target = $region16
        $region15: #{tpu_custom_call.1} parent=11 // pred_region
          _
        $region16: #{tpu_custom_call.1} parent=11 // pred_fallthru
          _
        // Predicated region
        $region17: #{tpu_custom_call.1} parent=11 // pred_check
          %p300 = pneg %p88
        $region18: #{tpu_custom_call.1} parent=11 // pred_check_branch
          %302 = sbr.rel (%p300) target = $region20
        $region19: #{tpu_custom_call.1} parent=11 // pred_region
          _
        $region20: #{tpu_custom_call.1} parent=11 // pred_fallthru
          _
        // Predicated region
        $region21: #{tpu_custom_call.1} parent=11 // pred_check
          %p303 = pneg %p109
        $region22: #{tpu_custom_call.1} parent=11 // pred_check_branch
          %305 = sbr.rel (%p303) target = $region24
        $region23: #{tpu_custom_call.1} parent=11 // pred_region
          _
        $region24: #{tpu_custom_call.1} parent=11 // pred_fallthru
          _
        // Predicated region
        $region25: #{tpu_custom_call.1} parent=11 // pred_check
          %p306 = pneg %p130
        $region26: #{tpu_custom_call.1} parent=11 // pred_check_branch
          %308 = sbr.rel (%p306) target = $region28
        $region27: #{tpu_custom_call.1} parent=11 // pred_region
          _
        $region28: #{tpu_custom_call.1} parent=11 // pred_fallthru
          _
        // Predicated region
        $region29: #{tpu_custom_call.1} parent=11 // pred_check
          %p309 = pneg %p151
        $region30: #{tpu_custom_call.1} parent=11 // pred_check_branch
          %311 = sbr.rel (%p309) target = $region32
        $region31: #{tpu_custom_call.1} parent=11 // pred_region
          _
        $region32: #{tpu_custom_call.1} parent=11 // pred_fallthru
          _
        // Predicated region
        $region33: #{tpu_custom_call.1} parent=11 // pred_check
          %p312 = pneg %p172
        $region34: #{tpu_custom_call.1} parent=11 // pred_check_branch
          %314 = sbr.rel (%p312) target = $region36
        $region35: #{tpu_custom_call.1} parent=11 // pred_region
          _
        $region36: #{tpu_custom_call.1} parent=11 // pred_fallthru
          _
        // Predicated region
        $region37: #{tpu_custom_call.1} parent=11 // pred_check
          %p315 = pneg %p193
        $region38: #{tpu_custom_call.1} parent=11 // pred_check_branch
          %317 = sbr.rel (%p315) target = $region40
        $region39: #{tpu_custom_call.1} parent=11 // pred_region
          _
        $region40: #{tpu_custom_call.1} parent=11 // pred_fallthru
          _
        // Predicated region
        $region41: #{tpu_custom_call.1} parent=11 // pred_check
          %p318 = pneg %p214
        $region42: #{tpu_custom_call.1} parent=11 // pred_check_branch
          %320 = sbr.rel (%p318) target = $region44
        $region43: #{tpu_custom_call.1} parent=11 // pred_region
          _
        $region44: #{tpu_custom_call.1} parent=11 // pred_fallthru
          _
        // Predicated region
        $region45: #{tpu_custom_call.1} parent=11 // pred_check
          %p321 = pneg %p235
        $region46: #{tpu_custom_call.1} parent=11 // pred_check_branch
          %323 = sbr.rel (%p321) target = $region48
        $region47: #{tpu_custom_call.1} parent=11 // pred_region
          _
        $region48: #{tpu_custom_call.1} parent=11 // pred_fallthru
          _
        // Predicated region
        $region49: #{tpu_custom_call.1} parent=11 // pred_check
          %p324 = pneg %p256
        $region50: #{tpu_custom_call.1} parent=11 // pred_check_branch
          %326 = sbr.rel (%p324) target = $region52
        $region51: #{tpu_custom_call.1} parent=11 // pred_region
          _
        $region52: #{tpu_custom_call.1} parent=11 // pred_fallthru
          _
      $region12: #{tpu_custom_call.1} parent=5 // pred_fallthru
        _
      %p327 = scmp.lt.s32.totalorder %s20, 2
      // Predicated region
      $region53: #{tpu_custom_call.1} parent=5 // pred_check
        %p328 = pneg %p327
      $region54: #{tpu_custom_call.1} parent=5 // pred_check_branch
        %330 = sbr.rel (%p328) target = $region56
      $region55: #{tpu_custom_call.1} parent=5 // pred_region
        // Predicated region
        $region57: #{tpu_custom_call.1} parent=55 // pred_check
          %p331 = pneg %p40
        $region58: #{tpu_custom_call.1} parent=55 // pred_check_branch
          %333 = sbr.rel (%p331) target = $region60
        $region59: #{tpu_custom_call.1} parent=55 // pred_region
          %p334 = scmp.lt.s32.totalorder %s20, 1
          %s335 = scalar_select %p334, %s20, 1
          %s336 = smul.addr %s335, 2
          %s337 = smul.addr %s336, 8
          %s338 = scalar_lea.vmem %s0, %s337
        $region60: #{tpu_custom_call.1} parent=55 // pred_fallthru
          _
      $region56: #{tpu_custom_call.1} parent=5 // pred_fallthru
        _
      %p339 = scmp.le.s32.totalorder 1, %s20
      %p340 = scmp.lt.s32.totalorder %s20, 3
      %p341 = pnand %p339, %p340
      %p342 = pneg %p341
      // Predicated region
      $region61: #{tpu_custom_call.1} parent=5 // pred_check
        _
      $region62: #{tpu_custom_call.1} parent=5 // pred_check_branch
        %344 = sbr.rel (%p341) target = $region64
      $region63: #{tpu_custom_call.1} parent=5 // pred_region
        %s345 = ssub.s32 %s20, 1
        %p346 = scmp.lt.s32.totalorder %s25, 1
        %s347 = scalar_select %p346, %s25, 1
        %s348 = smul.addr %s347, 2
        %s349 = smul.addr %s348, 8
        %s350 = scalar_lea.vmem %s0, %s349
        %p351 = pneg %p46
        %p352 = pneg %p43
        %p353 = pneg %p67
        %p354 = pneg %p64
        %p355 = pneg %p88
        %p356 = pneg %p85
        %p357 = pneg %p109
        %p358 = pneg %p106
        %p359 = pneg %p130
        %p360 = pneg %p127
        %p361 = pneg %p151
        %p362 = pneg %p148
        %p363 = pneg %p172
        %p364 = pneg %p169
        %p365 = pneg %p193
        %p366 = pneg %p190
        %p367 = pneg %p214
        %p368 = pneg %p211
        %p369 = pneg %p235
        %p370 = pneg %p232
        %p371 = pneg %p256
        %p372 = pneg %p253
        %p373 = pneg %p282
        %p374 = pneg %p279
        %s375 = sand.u32 %s269, 1
        %s376 = scalar_lea.sflag [#allocation3], %s375
        %s377 = sand.u32 %s269, 1
        %s378 = smul.addr %s377, 16
        %s379 = scalar_lea.vmem [#allocation2], %s378
        %p380 = scmp.lt.s32.totalorder %s25, 1
        %s381 = scalar_select %p380, %s25, 1
        %s382 = smul.addr %s381, 2
        %s383 = smul.addr %s382, 8
        %s384 = scalar_lea.vmem %s0, %s383
        %v385 = vld [vmem:[%s384] sm:$0xff]
        %v386 = vld [vmem:[%s384 + $0x8] sm:$0xff]
        %v387 = vlaneseq
        %v388 = vand.u32 %v387, 127
        %v389 = vadd.s32 %v388, 128
        %vm390 = vcmp.lt.s32.totalorder %v388, 0
        %v391 = vsub.s32 0, %v388
        %v392 = vsel %vm390, %v391, %v388
        %v393 = vshrl.u32 %v392, 4
        %v394 = vand.u32 %v392, 15
        %v395 = vsub.s32 0, %v394
        %v396 = vsel %vm390, %v395, %v394
        %vm397 = vcmp.lt.s32.totalorder %v389, 0
        %v398 = vsub.s32 0, %v389
        %v399 = vsel %vm397, %v398, %v389
        %v400 = vshrl.u32 %v399, 4
        %v401 = vand.u32 %v399, 15
        %v402 = vsub.s32 0, %v401
        %v403 = vsel %vm397, %v402, %v401
        %vm404 = vcmp.ne.s32.totalorder %v396, 0
        %vm405 = vcmp.ne.s32.totalorder %v403, 0
        %vm406 = vcmp.lt.s32.totalorder %v396, 0
        %vm407 = vcmp.lt.s32.totalorder %v403, 0
        %vm408 = vmand %vm406, %vm404
        %vm409 = vmand %vm407, %vm405
        %v410 = vadd.s32 %v396, 16
        %v411 = vadd.s32 %v403, 16
        %v412 = vsel %vm408, %v410, %v396
        %v413 = vsel %vm409, %v411, %v403
        %416 = vrot.lane.b32.xlu0 %v385, 1
        %v417 = vpop.permute.xlu0 %416
        %418 = vrot.lane.b32.xlu0 %v386, 1
        %v419 = vpop.permute.xlu0 %418
        %vm420 = vcmask 7168
        %v421 = vsel %vm420, %v417, %v419
        %v424 = vsel %vm420, 0.0, %v417
        %vm425 = vcmp.ge.s32.totalorder %v412, 1
        %vm426 = vcmp.ge.s32.totalorder %v413, 1
        %v427 = vsel %vm425, 1, 0
        %v428 = vsel %vm426, 1, 0
        %vm429 = vcmp.eq.s32.totalorder %v427, 1
        %vm430 = vcmp.eq.s32.totalorder %v428, 1
        %v431 = vsel %vm429, %v424, 0.0
        %v432 = vsel %vm430, %v421, 0.0
        %v433 = vld [vmem:[%s1] sm:$0xff]
        %435 = vset.pattern.permute.xlu0 0
        %436 = vperm.xlu0 %435, %v433
        %v437 = vpop.permute.xlu0 %436
        %v439 = vmul.f32 %v437, %v431
        %v440 = vmul.f32 %v437, %v432
        %s441 = scalar_lea.vmem %s1, 8
        %v442 = vld [vmem:[%s441] sm:$0xff]
        %444 = vset.pattern.permute.xlu0 0
        %445 = vperm.xlu0 %444, %v442
        %v446 = vpop.permute.xlu0 %445
        %v448 = vmul.f32 %v446, %v385
        %v449 = vmul.f32 %v446, %v386
        %v450 = vadd.f32 %v439, %v448
        %v451 = vadd.f32 %v440, %v449
        %452 = vrot.lane.b32.xlu0 %v385, 127
        %v453 = vpop.permute.xlu0 %452
        %454 = vrot.lane.b32.xlu0 %v386, 127
        %v455 = vpop.permute.xlu0 %454
        %vm456 = vcmask 1039360
        %v457 = vsel %vm456, %v453, %v455
        %v460 = vsel %vm456, %v455, 0.0
        %vm461 = vcmp.lt.s32.totalorder %v412, 15
        %vm462 = vcmp.lt.s32.totalorder %v413, 15
        %v463 = vsel %vm461, 1, 0
        %v464 = vsel %vm462, 1, 0
        %vm465 = vcmp.eq.s32.totalorder %v463, 1
        %vm466 = vcmp.eq.s32.totalorder %v464, 1
        %v467 = vsel %vm465, %v457, 0.0
        %v468 = vsel %vm466, %v460, 0.0
        %s469 = scalar_lea.vmem %s1, 16
        %v470 = vld [vmem:[%s469] sm:$0xff]
        %472 = vset.pattern.permute.xlu0 0
        %473 = vperm.xlu0 %472, %v470
        %v474 = vpop.permute.xlu0 %473
        %v476 = vmul.f32 %v474, %v467
        %v477 = vmul.f32 %v474, %v468
        %v478 = vadd.f32 %v450, %v476
        %v479 = vadd.f32 %v451, %v477
        %v480 = vld [vmem:[%s2] sm:$0xff]
        %482 = vset.pattern.permute.xlu0 0
        %483 = vperm.xlu0 %482, %v480
        %v484 = vpop.permute.xlu0 %483
        %v486 = vadd.f32 %v478, %v484
        %v487 = vadd.f32 %v479, %v484
        %490 = vrot.lane.b32.xlu0 %v486, 16
        %v491 = vpop.permute.xlu0 %490
        %492 = vrot.lane.b32.xlu0 %v487, 16
        %v493 = vpop.permute.xlu0 %492
        %vm494 = vcmask 130048
        %v495 = vsel %vm494, %v491, %v493
        %v498 = vsel %vm494, 0.0, %v491
        %v499 = vld [vmem:[%s3] sm:$0xff]
        %501 = vset.pattern.permute.xlu0 0
        %502 = vperm.xlu0 %501, %v499
        %v503 = vpop.permute.xlu0 %502
        %v505 = vmul.f32 %v503, %v498
        %v506 = vmul.f32 %v503, %v495
        %s507 = scalar_lea.vmem %s3, 8
        %v508 = vld [vmem:[%s507] sm:$0xff]
        %510 = vset.pattern.permute.xlu0 0
        %511 = vperm.xlu0 %510, %v508
        %v512 = vpop.permute.xlu0 %511
        %v514 = vmul.f32 %v512, %v486
        %v515 = vmul.f32 %v512, %v487
        %v516 = vadd.f32 %v505, %v514
        %v517 = vadd.f32 %v506, %v515
        %518 = vrot.lane.b32.xlu0 %v486, 112
        %v519 = vpop.permute.xlu0 %518
        %520 = vrot.lane.b32.xlu0 %v487, 112
        %v521 = vpop.permute.xlu0 %520
        %vm522 = vcmask 916480
        %v523 = vsel %vm522, %v519, %v521
        %v526 = vsel %vm522, %v521, 0.0
        %s527 = scalar_lea.vmem %s3, 16
        %v528 = vld [vmem:[%s527] sm:$0xff]
        %530 = vset.pattern.permute.xlu0 0
        %531 = vperm.xlu0 %530, %v528
        %v532 = vpop.permute.xlu0 %531
        %v534 = vmul.f32 %v532, %v523
        %v535 = vmul.f32 %v532, %v526
        %v536 = vadd.f32 %v516, %v534
        %v537 = vadd.f32 %v517, %v535
        %v538 = vld [vmem:[%s4] sm:$0xff]
        %540 = vset.pattern.permute.xlu0 0
        %541 = vperm.xlu0 %540, %v538
        %v542 = vpop.permute.xlu0 %541
        %v544 = vadd.f32 %v536, %v542
        %v545 = vadd.f32 %v537, %v542
        %548 = vrot.lane.b32.xlu0 %v544, 2
        %v549 = vpop.permute.xlu0 %548
        %550 = vrot.lane.b32.xlu0 %v545, 2
        %v551 = vpop.permute.xlu0 %550
        %vm552 = vcmask 15360
        %v553 = vsel %vm552, %v549, %v551
        %v556 = vsel %vm552, 0.0, %v549
        %vm557 = vcmp.ge.s32.totalorder %v412, 2
        %vm558 = vcmp.ge.s32.totalorder %v413, 2
        %v559 = vsel %vm557, 1, 0
        %v560 = vsel %vm558, 1, 0
        %vm561 = vcmp.eq.s32.totalorder %v559, 1
        %vm562 = vcmp.eq.s32.totalorder %v560, 1
        %v563 = vsel %vm561, %v556, 0.0
        %v564 = vsel %vm562, %v553, 0.0
        %v565 = vld [vmem:[%s5] sm:$0xff]
        %567 = vset.pattern.permute.xlu0 0
        %568 = vperm.xlu0 %567, %v565
        %v569 = vpop.permute.xlu0 %568
        %v571 = vmul.f32 %v569, %v563
        %v572 = vmul.f32 %v569, %v564
        %s573 = scalar_lea.vmem %s5, 8
        %v574 = vld [vmem:[%s573] sm:$0xff]
        %576 = vset.pattern.permute.xlu0 0
        %577 = vperm.xlu0 %576, %v574
        %v578 = vpop.permute.xlu0 %577
        %v580 = vmul.f32 %v578, %v544
        %v581 = vmul.f32 %v578, %v545
        %v582 = vadd.f32 %v571, %v580
        %v583 = vadd.f32 %v572, %v581
        %584 = vrot.lane.b32.xlu0 %v544, 126
        %v585 = vpop.permute.xlu0 %584
        %586 = vrot.lane.b32.xlu0 %v545, 126
        %v587 = vpop.permute.xlu0 %586
        %vm588 = vcmask 1031168
        %v589 = vsel %vm588, %v585, %v587
        %v592 = vsel %vm588, %v587, 0.0
        %vm593 = vcmp.lt.s32.totalorder %v412, 14
        %vm594 = vcmp.lt.s32.totalorder %v413, 14
        %v595 = vsel %vm593, 1, 0
        %v596 = vsel %vm594, 1, 0
        %vm597 = vcmp.eq.s32.totalorder %v595, 1
        %vm598 = vcmp.eq.s32.totalorder %v596, 1
        %v599 = vsel %vm597, %v589, 0.0
        %v600 = vsel %vm598, %v592, 0.0
        %s601 = scalar_lea.vmem %s5, 16
        %v602 = vld [vmem:[%s601] sm:$0xff]
        %604 = vset.pattern.permute.xlu0 0
        %605 = vperm.xlu0 %604, %v602
        %v606 = vpop.permute.xlu0 %605
        %v608 = vmul.f32 %v606, %v599
        %v609 = vmul.f32 %v606, %v600
        %v610 = vadd.f32 %v582, %v608
        %v611 = vadd.f32 %v583, %v609
        %v612 = vld [vmem:[%s6] sm:$0xff]
        %614 = vset.pattern.permute.xlu0 0
        %615 = vperm.xlu0 %614, %v612
        %v616 = vpop.permute.xlu0 %615
        %v618 = vadd.f32 %v610, %v616
        %v619 = vadd.f32 %v611, %v616
        %622 = vrot.lane.b32.xlu0 %v618, 32
        %v623 = vpop.permute.xlu0 %622
        %624 = vrot.lane.b32.xlu0 %v619, 32
        %v625 = vpop.permute.xlu0 %624
        %vm626 = vcmask 261120
        %v627 = vsel %vm626, %v623, %v625
        %v630 = vsel %vm626, 0.0, %v623
        %v631 = vld [vmem:[%s7] sm:$0xff]
        %633 = vset.pattern.permute.xlu0 0
        %634 = vperm.xlu0 %633, %v631
        %v635 = vpop.permute.xlu0 %634
        %v637 = vmul.f32 %v635, %v630
        %v638 = vmul.f32 %v635, %v627
        %s639 = scalar_lea.vmem %s7, 8
        %v640 = vld [vmem:[%s639] sm:$0xff]
        %642 = vset.pattern.permute.xlu0 0
        %643 = vperm.xlu0 %642, %v640
        %v644 = vpop.permute.xlu0 %643
        %v646 = vmul.f32 %v644, %v618
        %v647 = vmul.f32 %v644, %v619
        %v648 = vadd.f32 %v637, %v646
        %v649 = vadd.f32 %v638, %v647
        %650 = vrot.lane.b32.xlu0 %v618, 96
        %v651 = vpop.permute.xlu0 %650
        %652 = vrot.lane.b32.xlu0 %v619, 96
        %v653 = vpop.permute.xlu0 %652
        %vm654 = vcmask 785408
        %v655 = vsel %vm654, %v651, %v653
        %v658 = vsel %vm654, %v653, 0.0
        %s659 = scalar_lea.vmem %s7, 16
        %v660 = vld [vmem:[%s659] sm:$0xff]
        %662 = vset.pattern.permute.xlu0 0
        %663 = vperm.xlu0 %662, %v660
        %v664 = vpop.permute.xlu0 %663
        %v666 = vmul.f32 %v664, %v655
        %v667 = vmul.f32 %v664, %v658
        %v668 = vadd.f32 %v648, %v666
        %v669 = vadd.f32 %v649, %v667
        %v670 = vld [vmem:[%s8] sm:$0xff]
        %672 = vset.pattern.permute.xlu0 0
        %673 = vperm.xlu0 %672, %v670
        %v674 = vpop.permute.xlu0 %673
        %v676 = vadd.f32 %v668, %v674
        %v677 = vadd.f32 %v669, %v674
        %v678 = vld [vmem:[%s9] sm:$0xff]
        %v679 = vld [vmem:[%s10] sm:$0xff]
        %681 = vset.pattern.permute.xlu0 0
        %682 = vperm.xlu0 %681, %v679
        %v683 = vpop.permute.xlu0 %682
        %vm685 = vcmask 64512
        %v687 = vsel %vm685, %v678, 0
        %689 = vmatpush.msra.mxu0 0.0
        %690 = vmatpush.msra.mxu0 0.0
        %691 = vmatpush.msra.mxu0 0.0
        %692 = vmatpush.msra.mxu0 0.0
        %693 = vmatpush.msra.mxu0 0.0
        %694 = vmatpush.msra.mxu0 0.0
        %695 = vmatpush.msra.mxu0 0.0
        %696 = vmatpush.msra.mxu0 0.0
        %697 = vmatpush.msra.mxu0 0.0
        %698 = vmatpush.msra.mxu0 0.0
        %699 = vmatpush.msra.mxu0 0.0
        %700 = vmatpush.msra.mxu0 0.0
        %701 = vmatpush.msra.mxu0 0.0
        %702 = vmatpush.msra.mxu0 0.0
        %703 = vmatpush.msra.mxu0 0.0
        %704 = vmatpush.msra.mxu0 %v676
        %705 = vmatmul.f32.gmra.mxu0 %v687
        %v706 = vpop.f32.mrf.mxu0
        %v707 = vadd.f32 %v683, %v706
        %708 = vdwg.mxu0
        %709 = vmatpush.msra.mxu0 0.0
        %710 = vmatpush.msra.mxu0 0.0
        %711 = vmatpush.msra.mxu0 0.0
        %712 = vmatpush.msra.mxu0 0.0
        %713 = vmatpush.msra.mxu0 0.0
        %714 = vmatpush.msra.mxu0 0.0
        %715 = vmatpush.msra.mxu0 0.0
        %716 = vmatpush.msra.mxu0 0.0
        %717 = vmatpush.msra.mxu0 0.0
        %718 = vmatpush.msra.mxu0 0.0
        %719 = vmatpush.msra.mxu0 0.0
        %720 = vmatpush.msra.mxu0 0.0
        %721 = vmatpush.msra.mxu0 0.0
        %722 = vmatpush.msra.mxu0 0.0
        %723 = vmatpush.msra.mxu0 0.0
        %724 = vmatpush.msra.mxu0 %v677
        %725 = vmatmul.f32.gmra.mxu0 %v687
        %v726 = vpop.f32.mrf.mxu0
        %v727 = vadd.f32 %v683, %v726
        %728 = vdwg.mxu0
        %v729 = vmul.f32 %v385, %v707
        %v730 = vmul.f32 %v386, %v727
        %731 = vst [vmem:[%s379] sm:$0xff] %v729
        %732 = vst [vmem:[%s379 + $0x8] sm:$0xff] %v730
        %s733 = sand.u32 %s269, 1
        %s734 = scalar_lea.sflag [#allocation3], %s733
        %s735 = sand.u32 %s269, 1
        %s736 = smul.addr %s735, 16
        %s737 = scalar_lea.vmem [#allocation2], %s736
        // Predicated region
        $region65: #{tpu_custom_call.1} parent=63 // pred_check
          %p738 = pneg %p279
        $region66: #{tpu_custom_call.1} parent=63 // pred_check_branch
          %740 = sbr.rel (%p738) target = $region68
        $region67: #{tpu_custom_call.1} parent=63 // pred_region
          %742 = vsyncadd %s734, 0
          %s743 = smul.addr %s25, 2
          %s744 = smul.addr %s743, 8
          %s745 = scalar_lea.hbm %s11, %s744
          %s747 = sshll.u32 %s737, 4
          %s748 = int_to_ptr.vmem [resolvable:$true] %s747
          %s749 = sshll.u32 %s745, 4
          %s750 = int_to_ptr.hbm [resolvable:$true] %s749
          %752 = dma.vmem_to_hbm [thread:$0]  %s748, 256, %s750, %s734
        $region68: #{tpu_custom_call.1} parent=63 // pred_fallthru
          _
      $region64: #{tpu_custom_call.1} parent=5 // pred_fallthru
        _
      %p753 = scmp.le.s32.totalorder 2, %s20
      // Predicated region
      $region69: #{tpu_custom_call.1} parent=5 // pred_check
        %p754 = pneg %p753
      $region70: #{tpu_custom_call.1} parent=5 // pred_check_branch
        %756 = sbr.rel (%p754) target = $region72
      $region71: #{tpu_custom_call.1} parent=5 // pred_region
        %s757 = ssub.s32 %s20, 2
        // Predicated region
        $region73: #{tpu_custom_call.1} parent=71 // pred_check
          %p758 = pneg %p285
        $region74: #{tpu_custom_call.1} parent=71 // pred_check_branch
          %760 = sbr.rel (%p758) target = $region76
        $region75: #{tpu_custom_call.1} parent=71 // pred_region
          %s761 = sand.u32 %s270, 1
          %s762 = scalar_lea.sflag [#allocation3], %s761
          %s763 = sand.u32 %s270, 1
          %s764 = smul.addr %s763, 16
          %s765 = scalar_lea.vmem [#allocation2], %s764
          %767 = dma.done %s762, 256
        $region76: #{tpu_custom_call.1} parent=71 // pred_fallthru
          _
      $region72: #{tpu_custom_call.1} parent=5 // pred_fallthru
        _
    $region6: #{tpu_custom_call.1} parent=1 // loop_footer
      %s24 = sadd.s32 1, %s20
    $region7: #{tpu_custom_call.1} parent=1 // loop_footer_branch
      %19 = sbr.rel target = $region3
    $region8: #{tpu_custom_call.1} parent=1 // loop_exit
      _
    %768 = vsyncpa [#allocation3], 1
    %s769 = scalar_lea.sflag [#allocation3], 1
    %770 = vsyncpa %s769, 1

</llo_original>
